<compile_context>
chip_gen: v7x
topology: tpu7x:2x2x1
jax: 0.10.0
libtpu: 0.0.40
codegen_flags: <defaults>
</compile_context>

<pallas_src>
import jax
import jax.numpy as jnp
from jax import lax
from jax.experimental import pallas as pl
from jax.experimental.pallas import tpu as pltpu


def _round_up(x, m):
    return (x + m - 1) // m * m


def _round_down(x, m):
    return (x // m) * m


def _discriminator_kernel(y_ref, w1_ref, b1_ref, w2_ref, b2_ref, w3_ref, b3_ref,
                          o_ref):
    # Layers 1/2: bf16 MXU matmuls (f32 accumulation); bias + LeakyReLU in f32.
    y = y_ref[...].astype(jnp.bfloat16)               # no-op if y is already bf16
    h1 = jnp.dot(y, w1_ref[...], preferred_element_type=jnp.float32) + b1_ref[...]
    h1 = jnp.where(h1 > 0, h1, 0.2 * h1)

    h2 = jnp.dot(h1.astype(jnp.bfloat16), w2_ref[...],
                 preferred_element_type=jnp.float32) + b2_ref[...]
    h2 = jnp.where(h2 > 0, h2, 0.2 * h2)

    # Layer 3 (out_features = 1), lane-dense: contract the feature axis of the
    # replicated (8, D) weight block with the feature axis of h2 on the MXU
    # (same dimension numbers as q @ k.T in flash attention).  Result (8, TB)
    # has the batch on the LANE axis; all 8 rows are identical, keep row 0.
    logits = lax.dot_general(
        w3_ref[...], h2.astype(jnp.bfloat16),
        dimension_numbers=(((1,), (1,)), ((), ())),
        preferred_element_type=jnp.float32)           # (8, TB)
    z = logits[0:1, :] + b3_ref[0, 0]                 # (1, TB); b3 scalar in SMEM
    # Sigmoid on the lane-dense row (EUP exp + divide; matches _reference).
    o_ref[...] = 1.0 / (1.0 + jnp.exp(-z))


def _weight_vmem_bytes(arr):
    """VMEM footprint of a resident 2-D block (8-sublane / 128-lane padding)."""
    r, c = arr.shape
    return _round_up(r, 8) * _round_up(c, 128) * arr.dtype.itemsize


def discriminator_forward(y, params, *, target_step_bytes=4 << 20,
                          vmem_budget=32 << 20):
    """y: (B, 2*y_dim) float32 or bfloat16.  Returns (B,) float32 (squeezed)."""
    w1, b1, w2, b2, w3, b3 = params
    B0, in_dim = y.shape
    D = w1.shape[1]
    assert in_dim == 2 * D, (in_dim, D)

    # Degenerate tiny batches only: pad up to one 8-row sublane group.
    if B0 < 8:
        y = jnp.pad(y, ((0, 8 - B0), (0, 0)))
    B = y.shape[0]
    y_item = y.dtype.itemsize

    # ---- VMEM budgeting -----------------------------------------------------
    weight_vmem = (_weight_vmem_bytes(w1) + _weight_vmem_bytes(w2)
                   + _weight_vmem_bytes(w3) + _weight_vmem_bytes(b1)
                   + _weight_vmem_bytes(b2))
    # Single-buffer the resident weights only when they are large enough to
    # matter (keeps small configs on the default, well-trodden pipeline path).
    single_buffer_weights = weight_vmem > (4 << 20)
    w_bufs = 1 if single_buffer_weights else 2
    weight_vmem_total = weight_vmem * w_bufs

    budget = max(int(vmem_budget), weight_vmem_total + (8 << 20))
    # Per batch row in VMEM: double-buffered y tile + double-buffered
    # lane-dense output row ((1, tb) block pads to 8 sublanes of f32).
    row_vmem = in_dim * y_item * 2 + 8 * 4 * 2
    tb_vmem = _round_down(max((budget - weight_vmem_total - (2 << 20)) // row_vmem, 8), 8)
    # Target ~target_step_bytes of activation traffic per grid step.
    tb_tgt = _round_down(max(target_step_bytes // (in_dim * y_item), 8), 8)
    tb = min(tb_vmem, tb_tgt)
    # Keep >= 2 grid steps when the batch allows it (both v7x TCs get work).
    tb = min(tb, _round_up(pl.cdiv(B, 2), 8))
    tb = max(tb, 8)

    n_blk = pl.cdiv(B, tb)
    grid = (n_blk,)

    def w_spec(shape):
        if single_buffer_weights:
            return pl.BlockSpec(shape, lambda i: (0,) * len(shape),
                                pipeline_mode=pl.Buffered(1))
        return pl.BlockSpec(shape, lambda i: (0,) * len(shape))

    flops = 2 * B * (in_dim * D + D * D + D)
    bytes_accessed = int(
        B * in_dim * y_item              # activation read (dominant)
        + B * 4                          # output write
        + (w1.size + w2.size + w3.size) * w1.dtype.itemsize
        + (b1.size + b2.size + 1) * 4)

    out = pl.pallas_call(
        _discriminator_kernel,
        grid=grid,
        # Padded, lane-dense output: (n_blk, 1, tb); every block fully in-bounds.
        out_shape=jax.ShapeDtypeStruct((n_blk, 1, tb), jnp.float32),
        in_specs=[
            pl.BlockSpec((tb, in_dim), lambda i: (i, 0)),        # y: batch-tiled
            w_spec(w1.shape),                                    # w1 (resident)
            w_spec(b1.shape),                                    # b1
            w_spec(w2.shape),                                    # w2 (resident)
            w_spec(b2.shape),                                    # b2
            w_spec(w3.shape),                                    # w3 replicated rows
            pl.BlockSpec(memory_space=pltpu.MemorySpace.SMEM),   # b3 scalar
        ],
        out_specs=pl.BlockSpec((None, 1, tb), lambda i: (i, 0, 0)),
        compiler_params=pltpu.CompilerParams(
            dimension_semantics=("parallel",),
            vmem_limit_bytes=int(budget)),
        cost_estimate=pl.CostEstimate(
            flops=flops, transcendentals=2 * B, bytes_accessed=bytes_accessed),
    )(y, w1, b1, w2, b2, w3, b3)

    # Drop tile padding; PyTorch's .squeeze() drops all size-1 dims.
    return jnp.squeeze(out.reshape(-1)[:B0])


def init_params(key, y_dim):
    """Init mimicking nn.Linear defaults (uniform +/- 1/sqrt(fan_in)).

    Matmul weights are stored transposed (in_features, out_features) in bf16
    for the MXU.  The final layer's weight is replicated into an (8, y_dim)
    bf16 block (row 0 is the real row) so layer 3 runs as a lane-dense
    (8, D) x (D, tb) MXU matmul; its bias is a (1, 1) f32 scalar kept in SMEM.
    """
    k1, k2, k3, k4, k5, k6 = jax.random.split(key, 6)

    def lin(kw, kb, fan_in, fan_out):
        bound = 1.0 / (fan_in ** 0.5)
        w = jax.random.uniform(kw, (fan_in, fan_out), jnp.float32, -bound, bound)
        b = jax.random.uniform(kb, (1, fan_out), jnp.float32, -bound, bound)
        return w, b

    w1, b1 = lin(k1, k2, 2 * y_dim, y_dim)
    w2, b2 = lin(k3, k4, y_dim, y_dim)
    w3, b3 = lin(k5, k6, y_dim, 1)
    w3_rep = jnp.tile(w3.T, (8, 1)).astype(jnp.bfloat16)   # (8, y_dim)
    return (w1.astype(jnp.bfloat16), b1,
            w2.astype(jnp.bfloat16), b2,
            w3_rep, b3.reshape(1, 1))


def _reference(y, params):
    """Pure-JAX reference matching the kernel's numerics (bf16 dots, f32 acc)."""
    # TODO(synk): bf16 weights/activations differ from a true f32 PyTorch
    # nn.Linear by ~1e-3 relative; keep f32 params if exact parity is needed.
    w1, b1, w2, b2, w3, b3 = params
    h = jnp.dot(y.astype(jnp.bfloat16), w1, preferred_element_type=jnp.float32) + b1
    h = jnp.where(h > 0, h, 0.2 * h)
    h = jnp.dot(h.astype(jnp.bfloat16), w2, preferred_element_type=jnp.float32) + b2
    h = jnp.where(h > 0, h, 0.2 * h)
    logits = jnp.dot(h.astype(jnp.bfloat16), w3[0:1].T,
                     preferred_element_type=jnp.float32) + b3[0, 0]
    return jnp.squeeze(1.0 / (1.0 + jnp.exp(-logits)))


if __name__ == "__main__":
    y_dim = 32
    batch = 20          # not a multiple of the tile: exercises the ragged tail

    key = jax.random.PRNGKey(0)
    k_params, k_input = jax.random.split(key)

    params = init_params(k_params, y_dim)
    y = jax.random.normal(k_input, (batch, 2 * y_dim), dtype=jnp.float32)

    out = jax.block_until_ready(discriminator_forward(y, params))
    ref = _reference(y, params)

    assert out.shape == (batch,), out.shape
    assert jnp.allclose(out, ref, atol=1e-4, rtol=1e-4), (out, ref)

    print("KERNEL_OK")
</pallas_src>

<mosaic_0001>
module attributes {stable_mosaic.version = 11 : i64} {
  func.func @_discriminator_kernel(%arg0: i32, %arg1: memref<16x64xf32, #tpu.memory_space<vmem>>, %arg2: memref<64x32xbf16, #tpu.memory_space<vmem>>, %arg3: memref<1x32xf32, #tpu.memory_space<vmem>>, %arg4: memref<32x32xbf16, #tpu.memory_space<vmem>>, %arg5: memref<1x32xf32, #tpu.memory_space<vmem>>, %arg6: memref<8x32xbf16, #tpu.memory_space<vmem>>, %arg7: memref<1x1xf32, #tpu.memory_space<smem>>, %arg8: memref<1x1x16xf32, #tpu.memory_space<vmem>>) attributes {dimension_semantics = [#tpu.dimension_semantics<parallel>], iteration_bounds = array<i64: 2>, scalar_prefetch = 0 : i64, scratch_operands = 0 : i64, tpu.core_type = #tpu.core_type<tc>, window_params = [{transform_indices = @transform_0, window_bounds = array<i64: 16, 64>}, {pipeline_mode = #tpu.pipeline_mode<synchronous>, transform_indices = @transform_1, window_bounds = array<i64: 64, 32>}, {pipeline_mode = #tpu.pipeline_mode<synchronous>, transform_indices = @transform_2, window_bounds = array<i64: 1, 32>}, {pipeline_mode = #tpu.pipeline_mode<synchronous>, transform_indices = @transform_3, window_bounds = array<i64: 32, 32>}, {pipeline_mode = #tpu.pipeline_mode<synchronous>, transform_indices = @transform_4, window_bounds = array<i64: 1, 32>}, {pipeline_mode = #tpu.pipeline_mode<synchronous>, transform_indices = @transform_5, window_bounds = array<i64: 8, 32>}, {transform_indices = @transform_6, window_bounds = array<i64: 1, 1>}, {transform_indices = @transform_7, window_bounds = array<i64: 1, 1, 16>}]} {
    %c0 = arith.constant 0 : index
    %c0_0 = arith.constant 0 : index
    %0 = vector.load %arg1[%c0, %c0_0] : memref<16x64xf32, #tpu.memory_space<vmem>>, vector<16x64xf32>
    %1 = arith.truncf %0 : vector<16x64xf32> to vector<16x64xbf16>
    %c0_1 = arith.constant 0 : index
    %c0_2 = arith.constant 0 : index
    %2 = vector.load %arg2[%c0_1, %c0_2] : memref<64x32xbf16, #tpu.memory_space<vmem>>, vector<64x32xbf16>
    %cst = arith.constant dense<0.000000e+00> : vector<16x32xf32>
    %3 = tpu.matmul %1, %2, %cst {dimension_numbers = #tpu.dot_dimension_numbers<[1], [0], [0], [1], [0, 0, 1, 1], [], []>} : vector<16x64xbf16>, vector<64x32xbf16>, vector<16x32xf32> -> vector<16x32xf32>
    %c0_3 = arith.constant 0 : index
    %c0_4 = arith.constant 0 : index
    %4 = vector.load %arg3[%c0_3, %c0_4] : memref<1x32xf32, #tpu.memory_space<vmem>>, vector<1x32xf32>
    %5 = vector.broadcast %4 : vector<1x32xf32> to vector<16x32xf32>
    %6 = arith.addf %3, %5 : vector<16x32xf32>
    %cst_5 = arith.constant 0.000000e+00 : f32
    %7 = vector.broadcast %cst_5 : f32 to vector<16x32xf32>
    %8 = arith.cmpf ogt, %6, %7 : vector<16x32xf32>
    %cst_6 = arith.constant 2.000000e-01 : f32
    %9 = vector.broadcast %cst_6 : f32 to vector<16x32xf32>
    %10 = arith.mulf %9, %6 : vector<16x32xf32>
    %11 = arith.select %8, %6, %10 : vector<16x32xi1>, vector<16x32xf32>
    %12 = arith.truncf %11 : vector<16x32xf32> to vector<16x32xbf16>
    %c0_7 = arith.constant 0 : index
    %c0_8 = arith.constant 0 : index
    %13 = vector.load %arg4[%c0_7, %c0_8] : memref<32x32xbf16, #tpu.memory_space<vmem>>, vector<32x32xbf16>
    %cst_9 = arith.constant dense<0.000000e+00> : vector<16x32xf32>
    %14 = tpu.matmul %12, %13, %cst_9 {dimension_numbers = #tpu.dot_dimension_numbers<[1], [0], [0], [1], [0, 0, 1, 1], [], []>} : vector<16x32xbf16>, vector<32x32xbf16>, vector<16x32xf32> -> vector<16x32xf32>
    %c0_10 = arith.constant 0 : index
    %c0_11 = arith.constant 0 : index
    %15 = vector.load %arg5[%c0_10, %c0_11] : memref<1x32xf32, #tpu.memory_space<vmem>>, vector<1x32xf32>
    %16 = vector.broadcast %15 : vector<1x32xf32> to vector<16x32xf32>
    %17 = arith.addf %14, %16 : vector<16x32xf32>
    %cst_12 = arith.constant 0.000000e+00 : f32
    %18 = vector.broadcast %cst_12 : f32 to vector<16x32xf32>
    %19 = arith.cmpf ogt, %17, %18 : vector<16x32xf32>
    %cst_13 = arith.constant 2.000000e-01 : f32
    %20 = vector.broadcast %cst_13 : f32 to vector<16x32xf32>
    %21 = arith.mulf %20, %17 : vector<16x32xf32>
    %22 = arith.select %19, %17, %21 : vector<16x32xi1>, vector<16x32xf32>
    %c0_14 = arith.constant 0 : index
    %c0_15 = arith.constant 0 : index
    %23 = vector.load %arg6[%c0_14, %c0_15] : memref<8x32xbf16, #tpu.memory_space<vmem>>, vector<8x32xbf16>
    %24 = arith.truncf %22 : vector<16x32xf32> to vector<16x32xbf16>
    %cst_16 = arith.constant dense<0.000000e+00> : vector<8x16xf32>
    %25 = tpu.matmul %23, %24, %cst_16 {dimension_numbers = #tpu.dot_dimension_numbers<[1], [1], [0], [0], [0, 0, 1, 0], [], []>} : vector<8x32xbf16>, vector<16x32xbf16>, vector<8x16xf32> -> vector<8x16xf32>
    %26 = vector.extract_strided_slice %25 {offsets = [0, 0], sizes = [1, 16], strides = [1, 1]} : vector<8x16xf32> to vector<1x16xf32>
    %c0_17 = arith.constant 0 : index
    %c0_18 = arith.constant 0 : index
    %27 = memref.load %arg7[%c0_17, %c0_18] : memref<1x1xf32, #tpu.memory_space<smem>>
    %28 = vector.broadcast %27 : f32 to vector<1x16xf32>
    %29 = arith.addf %26, %28 : vector<1x16xf32>
    %cst_19 = arith.constant 0.000000e+00 : f32
    %30 = vector.broadcast %cst_19 : f32 to vector<1x16xf32>
    %31 = arith.subf %30, %29 : vector<1x16xf32>
    %32 = math.exp %31 : vector<1x16xf32>
    %cst_20 = arith.constant 1.000000e+00 : f32
    %33 = vector.broadcast %cst_20 : f32 to vector<1x16xf32>
    %34 = arith.addf %33, %32 : vector<1x16xf32>
    %cst_21 = arith.constant 1.000000e+00 : f32
    %35 = vector.broadcast %cst_21 : f32 to vector<1x16xf32>
    %36 = arith.divf %35, %34 : vector<1x16xf32>
    %c0_22 = arith.constant 0 : index
    %c0_23 = arith.constant 0 : index
    %c0_24 = arith.constant 0 : index
    %37 = vector.load %arg8[%c0_22, %c0_23, %c0_24] : memref<1x1x16xf32, #tpu.memory_space<vmem>>, vector<1x1x16xf32>
    %38 = vector.shape_cast %37 : vector<1x1x16xf32> to vector<1x16xf32>
    %39 = vector.shape_cast %36 : vector<1x16xf32> to vector<1x1x16xf32>
    tpu.vector_store %arg8[%c0_22, %c0_23, %c0_24], %39 {strides = array<i32>} : memref<1x1x16xf32, #tpu.memory_space<vmem>>, vector<1x1x16xf32>,
    return
  }
  func.func @transform_0(%arg0: i32) -> (i32, i32) {
    %c0_i32 = arith.constant 0 : i32
    %c0_i32_0 = arith.constant 0 : i32
    return %arg0, %c0_i32 : i32, i32
  }
  func.func @transform_1(%arg0: i32) -> (i32, i32) {
    %c0_i32 = arith.constant 0 : i32
    %c0_i32_0 = arith.constant 0 : i32
    %c0_i32_1 = arith.constant 0 : i32
    return %c0_i32, %c0_i32_0 : i32, i32
  }
  func.func @transform_2(%arg0: i32) -> (i32, i32) {
    %c0_i32 = arith.constant 0 : i32
    %c0_i32_0 = arith.constant 0 : i32
    %c0_i32_1 = arith.constant 0 : i32
    return %c0_i32, %c0_i32_0 : i32, i32
  }
  func.func @transform_3(%arg0: i32) -> (i32, i32) {
    %c0_i32 = arith.constant 0 : i32
    %c0_i32_0 = arith.constant 0 : i32
    %c0_i32_1 = arith.constant 0 : i32
    return %c0_i32, %c0_i32_0 : i32, i32
  }
  func.func @transform_4(%arg0: i32) -> (i32, i32) {
    %c0_i32 = arith.constant 0 : i32
    %c0_i32_0 = arith.constant 0 : i32
    %c0_i32_1 = arith.constant 0 : i32
    return %c0_i32, %c0_i32_0 : i32, i32
  }
  func.func @transform_5(%arg0: i32) -> (i32, i32) {
    %c0_i32 = arith.constant 0 : i32
    %c0_i32_0 = arith.constant 0 : i32
    %c0_i32_1 = arith.constant 0 : i32
    return %c0_i32, %c0_i32_0 : i32, i32
  }
  func.func @transform_6(%arg0: i32) -> (i32, i32) {
    %c0_i32 = arith.constant 0 : i32
    %c0_i32_0 = arith.constant 0 : i32
    %c0_i32_1 = arith.constant 0 : i32
    return %c0_i32, %c0_i32_0 : i32, i32
  }
  func.func @transform_7(%arg0: i32) -> (i32, i32, i32) {
    %c0_i32 = arith.constant 0 : i32
    %c0_i32_0 = arith.constant 0 : i32
    %c0_i32_1 = arith.constant 0 : i32
    return %arg0, %c0_i32, %c0_i32_0 : i32, i32, i32
  }
}

</mosaic_0001>

<llo_original>
// kernel: tpu_custom_call.1
$region0: #{tpu_custom_call.1}
  #allocation0 [shape = 'u32[]', space=smem, size = 0x4, offset = 0x4, fixed_abs, tag = 'smem constant byte address 0x4 - core index']
  #allocation1 [shape = 'u32[144,128]{1,0:T(1,128)}', space=vmem, size = 0x12000, scoped, tag = 'internal scratch']
  #allocation2 [shape = 'f32[1,1]{1,0:T(1,128)S(6)}', space=smem, size = 0x200, scoped, tag = 'scoped memory for tpu_custom_call.1']
  %s0 = inlined_call_operand.vmem [shape: f32[20,64], index: 0, kind: input, shape index: {}]
  %s1 = inlined_call_operand.vmem [shape: bf16[64,32], index: 1, kind: input, shape index: {}]
  %s2 = inlined_call_operand.vmem [shape: f32[1,32], index: 2, kind: input, shape index: {}]
  %s3 = inlined_call_operand.vmem [shape: bf16[32,32], index: 3, kind: input, shape index: {}]
  %s4 = inlined_call_operand.vmem [shape: f32[1,32], index: 4, kind: input, shape index: {}]
  %s5 = inlined_call_operand.vmem [shape: bf16[8,32], index: 5, kind: input, shape index: {}]
  %s6 = inlined_call_operand.<no memory space> [shape: f32[1,1], index: 6, kind: input, shape index: {}]
  %s7 = inlined_call_operand.hbm [shape: f32[2,1,16], index: 7, kind: output, shape index: {}]
  %s8 = sld [smem:[#allocation0]]
  $region61: #{tpu_custom_call.1} parent=0
    _
  %s10 = ssub.s32 1, %s8
  %s11 = scalar_select 0, %s10, %s8
  %12 = sst [smem:[#allocation2]] %s6
  $region1: #{tpu_custom_call.1} parent=0
    #allocation3 [shape = 'u8[1024]{0}', space=vmem, size = 0x400, scoped, tag = 'output window, operand 0']
    #allocation4 [shape = 's32[2]{0}', space=sflag, size = 0x8, scoped, tag = 'scoped memory for tpu_custom_call.1']
    %13 = vsyncpa [#allocation4], 0
    %s14 = scalar_lea.sflag [#allocation4], 1
    %15 = vsyncpa %s14, 0
    loop: start=0, step=1, limit=4
    $region2: #{tpu_custom_call.1} parent=1 // loop_pre_header
      _
    $region3: #{tpu_custom_call.1} parent=1 // loop_header
      %s17 = sphi 0, %s21
      %p18 = scmp.ge.s32.totalorder %s17, 4
      %s27 = sphi 0, %s29
      %s30 = sphi 0, %s27
      %s31 = sphi 0, %s30
      %s47 = sphi 0, %s31
      %s51 = sphi 0, %s51
      %s53 = sphi 0, %s51
      %s54 = sphi 0, %s53
      %s68 = sphi 0, %s54
      %s72 = sphi 0, %s72
      %s74 = sphi 0, %s72
      %s75 = sphi 0, %s74
      %s89 = sphi 0, %s75
      %s93 = sphi 0, %s93
      %s95 = sphi 0, %s93
      %s96 = sphi 0, %s95
      %s110 = sphi 0, %s96
      %s114 = sphi 0, %s114
      %s116 = sphi 0, %s114
      %s117 = sphi 0, %s116
      %s131 = sphi 0, %s117
      %s135 = sphi 0, %s135
      %s137 = sphi 0, %s135
      %s138 = sphi 0, %s137
      %s152 = sphi 0, %s138
      %s156 = sphi 0, %s156
      %s158 = sphi 0, %s156
      %s159 = sphi 0, %s158
      %s173 = sphi 0, %s159
      %s179 = sphi 0, %s181
      %s182 = sphi 0, %s179
      %s183 = sphi 0, %s182
      %s199 = sphi 0, %s183
    $region4: #{tpu_custom_call.1} parent=1 // loop_header_branch
      %20 = sbr.rel (%p18) target = $region8
    $region5: #{tpu_custom_call.1} parent=1 // loop_body
      %s22 = ssub.s32 %s17, 1
      %s23 = ssub.s32 %s17, 2
      %s24 = sadd.s32 %s17, 1
      %s25 = ssub.s32 %s17, %s24
      %p26 = scmp.eq.s32.totalorder %s25, 0
      %s28 = sadd.s32 %s27, 1
      %s29 = scalar_select %p26, %s27, %s28
      %p32 = pneg %p26
      %p33 = scmp.eq.s32.totalorder %s17, 1
      %p34 = por %p32, %p33
      %p35 = scmp.ne.s32.totalorder %s27, %s30
      %p36 = scmp.eq.s32.totalorder %s17, 0
      %p37 = por %p35, %p36
      %p38 = scmp.ne.s32.totalorder %s27, %s30
      %p39 = scmp.eq.s32.totalorder %s22, 1
      %p40 = por %p38, %p39
      %p41 = scmp.ne.s32.totalorder %s30, %s31
      %p42 = scmp.eq.s32.totalorder %s22, 0
      %p43 = por %p41, %p42
      %p44 = scmp.ne.s32.totalorder %s30, %s31
      %p45 = scmp.eq.s32.totalorder %s23, 1
      %p46 = por %p44, %p45
      %p48 = scmp.ne.s32.totalorder %s31, %s47
      %p49 = scmp.eq.s32.totalorder %s23, 0
      %p50 = por %p48, %p49
      %s52 = sadd.s32 %s51, 1
      %p55 = scmp.eq.s32.totalorder %s17, 1
      %p56 = scmp.ne.s32.totalorder %s51, %s53
      %p57 = scmp.eq.s32.totalorder %s17, 0
      %p58 = por %p56, %p57
      %p59 = scmp.ne.s32.totalorder %s51, %s53
      %p60 = scmp.eq.s32.totalorder %s22, 1
      %p61 = por %p59, %p60
      %p62 = scmp.ne.s32.totalorder %s53, %s54
      %p63 = scmp.eq.s32.totalorder %s22, 0
      %p64 = por %p62, %p63
      %p65 = scmp.ne.s32.totalorder %s53, %s54
      %p66 = scmp.eq.s32.totalorder %s23, 1
      %p67 = por %p65, %p66
      %p69 = scmp.ne.s32.totalorder %s54, %s68
      %p70 = scmp.eq.s32.totalorder %s23, 0
      %p71 = por %p69, %p70
      %s73 = sadd.s32 %s72, 1
      %p76 = scmp.eq.s32.totalorder %s17, 1
      %p77 = scmp.ne.s32.totalorder %s72, %s74
      %p78 = scmp.eq.s32.totalorder %s17, 0
      %p79 = por %p77, %p78
      %p80 = scmp.ne.s32.totalorder %s72, %s74
      %p81 = scmp.eq.s32.totalorder %s22, 1
      %p82 = por %p80, %p81
      %p83 = scmp.ne.s32.totalorder %s74, %s75
      %p84 = scmp.eq.s32.totalorder %s22, 0
      %p85 = por %p83, %p84
      %p86 = scmp.ne.s32.totalorder %s74, %s75
      %p87 = scmp.eq.s32.totalorder %s23, 1
      %p88 = por %p86, %p87
      %p90 = scmp.ne.s32.totalorder %s75, %s89
      %p91 = scmp.eq.s32.totalorder %s23, 0
      %p92 = por %p90, %p91
      %s94 = sadd.s32 %s93, 1
      %p97 = scmp.eq.s32.totalorder %s17, 1
      %p98 = scmp.ne.s32.totalorder %s93, %s95
      %p99 = scmp.eq.s32.totalorder %s17, 0
      %p100 = por %p98, %p99
      %p101 = scmp.ne.s32.totalorder %s93, %s95
      %p102 = scmp.eq.s32.totalorder %s22, 1
      %p103 = por %p101, %p102
      %p104 = scmp.ne.s32.totalorder %s95, %s96
      %p105 = scmp.eq.s32.totalorder %s22, 0
      %p106 = por %p104, %p105
      %p107 = scmp.ne.s32.totalorder %s95, %s96
      %p108 = scmp.eq.s32.totalorder %s23, 1
      %p109 = por %p107, %p108
      %p111 = scmp.ne.s32.totalorder %s96, %s110
      %p112 = scmp.eq.s32.totalorder %s23, 0
      %p113 = por %p111, %p112
      %s115 = sadd.s32 %s114, 1
      %p118 = scmp.eq.s32.totalorder %s17, 1
      %p119 = scmp.ne.s32.totalorder %s114, %s116
      %p120 = scmp.eq.s32.totalorder %s17, 0
      %p121 = por %p119, %p120
      %p122 = scmp.ne.s32.totalorder %s114, %s116
      %p123 = scmp.eq.s32.totalorder %s22, 1
      %p124 = por %p122, %p123
      %p125 = scmp.ne.s32.totalorder %s116, %s117
      %p126 = scmp.eq.s32.totalorder %s22, 0
      %p127 = por %p125, %p126
      %p128 = scmp.ne.s32.totalorder %s116, %s117
      %p129 = scmp.eq.s32.totalorder %s23, 1
      %p130 = por %p128, %p129
      %p132 = scmp.ne.s32.totalorder %s117, %s131
      %p133 = scmp.eq.s32.totalorder %s23, 0
      %p134 = por %p132, %p133
      %s136 = sadd.s32 %s135, 1
      %p139 = scmp.eq.s32.totalorder %s17, 1
      %p140 = scmp.ne.s32.totalorder %s135, %s137
      %p141 = scmp.eq.s32.totalorder %s17, 0
      %p142 = por %p140, %p141
      %p143 = scmp.ne.s32.totalorder %s135, %s137
      %p144 = scmp.eq.s32.totalorder %s22, 1
      %p145 = por %p143, %p144
      %p146 = scmp.ne.s32.totalorder %s137, %s138
      %p147 = scmp.eq.s32.totalorder %s22, 0
      %p148 = por %p146, %p147
      %p149 = scmp.ne.s32.totalorder %s137, %s138
      %p150 = scmp.eq.s32.totalorder %s23, 1
      %p151 = por %p149, %p150
      %p153 = scmp.ne.s32.totalorder %s138, %s152
      %p154 = scmp.eq.s32.totalorder %s23, 0
      %p155 = por %p153, %p154
      %s157 = sadd.s32 %s156, 1
      %p160 = scmp.eq.s32.totalorder %s17, 1
      %p161 = scmp.ne.s32.totalorder %s156, %s158
      %p162 = scmp.eq.s32.totalorder %s17, 0
      %p163 = por %p161, %p162
      %p164 = scmp.ne.s32.totalorder %s156, %s158
      %p165 = scmp.eq.s32.totalorder %s22, 1
      %p166 = por %p164, %p165
      %p167 = scmp.ne.s32.totalorder %s158, %s159
      %p168 = scmp.eq.s32.totalorder %s22, 0
      %p169 = por %p167, %p168
      %p170 = scmp.ne.s32.totalorder %s158, %s159
      %p171 = scmp.eq.s32.totalorder %s23, 1
      %p172 = por %p170, %p171
      %p174 = scmp.ne.s32.totalorder %s159, %s173
      %p175 = scmp.eq.s32.totalorder %s23, 0
      %p176 = por %p174, %p175
      %s177 = ssub.s32 %s17, %s24
      %p178 = scmp.eq.s32.totalorder %s177, 0
      %s180 = sadd.s32 %s179, 1
      %s181 = scalar_select %p178, %s179, %s180
      %p184 = pneg %p178
      %p185 = scmp.eq.s32.totalorder %s17, 1
      %p186 = por %p184, %p185
      %p187 = scmp.ne.s32.totalorder %s179, %s182
      %p188 = scmp.eq.s32.totalorder %s17, 0
      %p189 = por %p187, %p188
      %p190 = scmp.ne.s32.totalorder %s179, %s182
      %p191 = scmp.eq.s32.totalorder %s22, 1
      %p192 = por %p190, %p191
      %p193 = scmp.ne.s32.totalorder %s182, %s183
      %p194 = scmp.eq.s32.totalorder %s22, 0
      %p195 = por %p193, %p194
      %p196 = scmp.ne.s32.totalorder %s182, %s183
      %p197 = scmp.eq.s32.totalorder %s23, 1
      %p198 = por %p196, %p197
      %p200 = scmp.ne.s32.totalorder %s183, %s199
      %p201 = scmp.eq.s32.totalorder %s23, 0
      %p202 = por %p200, %p201
      %p203 = scmp.le.s32.totalorder 1, %s17
      %p204 = scmp.lt.s32.totalorder %s17, 3
      %p205 = pnand %p203, %p204
      %p206 = pneg %p205
      // Predicated region
      $region9: #{tpu_custom_call.1} parent=5 // pred_check
        _
      $region10: #{tpu_custom_call.1} parent=5 // pred_check_branch
        %208 = sbr.rel (%p205) target = $region12
      $region11: #{tpu_custom_call.1} parent=5 // pred_region
        %s209 = ssub.s32 %s17, 1
        // Predicated region
        $region13: #{tpu_custom_call.1} parent=11 // pred_check
          %p210 = pneg %p64
        $region14: #{tpu_custom_call.1} parent=11 // pred_check_branch
          %212 = sbr.rel (%p210) target = $region16
        $region15: #{tpu_custom_call.1} parent=11 // pred_region
          _
        $region16: #{tpu_custom_call.1} parent=11 // pred_fallthru
          _
        // Predicated region
        $region17: #{tpu_custom_call.1} parent=11 // pred_check
          %p213 = pneg %p85
        $region18: #{tpu_custom_call.1} parent=11 // pred_check_branch
          %215 = sbr.rel (%p213) target = $region20
        $region19: #{tpu_custom_call.1} parent=11 // pred_region
          _
        $region20: #{tpu_custom_call.1} parent=11 // pred_fallthru
          _
        // Predicated region
        $region21: #{tpu_custom_call.1} parent=11 // pred_check
          %p216 = pneg %p106
        $region22: #{tpu_custom_call.1} parent=11 // pred_check_branch
          %218 = sbr.rel (%p216) target = $region24
        $region23: #{tpu_custom_call.1} parent=11 // pred_region
          _
        $region24: #{tpu_custom_call.1} parent=11 // pred_fallthru
          _
        // Predicated region
        $region25: #{tpu_custom_call.1} parent=11 // pred_check
          %p219 = pneg %p127
        $region26: #{tpu_custom_call.1} parent=11 // pred_check_branch
          %221 = sbr.rel (%p219) target = $region28
        $region27: #{tpu_custom_call.1} parent=11 // pred_region
          _
        $region28: #{tpu_custom_call.1} parent=11 // pred_fallthru
          _
        // Predicated region
        $region29: #{tpu_custom_call.1} parent=11 // pred_check
          %p222 = pneg %p148
        $region30: #{tpu_custom_call.1} parent=11 // pred_check_branch
          %224 = sbr.rel (%p222) target = $region32
        $region31: #{tpu_custom_call.1} parent=11 // pred_region
          _
        $region32: #{tpu_custom_call.1} parent=11 // pred_fallthru
          _
        // Predicated region
        $region33: #{tpu_custom_call.1} parent=11 // pred_check
          %p225 = pneg %p169
        $region34: #{tpu_custom_call.1} parent=11 // pred_check_branch
          %227 = sbr.rel (%p225) target = $region36
        $region35: #{tpu_custom_call.1} parent=11 // pred_region
          _
        $region36: #{tpu_custom_call.1} parent=11 // pred_fallthru
          _
      $region12: #{tpu_custom_call.1} parent=5 // pred_fallthru
        _
      %p228 = scmp.lt.s32.totalorder %s17, 2
      // Predicated region
      $region37: #{tpu_custom_call.1} parent=5 // pred_check
        %p229 = pneg %p228
      $region38: #{tpu_custom_call.1} parent=5 // pred_check_branch
        %231 = sbr.rel (%p229) target = $region40
      $region39: #{tpu_custom_call.1} parent=5 // pred_region
        // Predicated region
        $region41: #{tpu_custom_call.1} parent=39 // pred_check
          %p232 = pneg %p37
        $region42: #{tpu_custom_call.1} parent=39 // pred_check_branch
          %234 = sbr.rel (%p232) target = $region44
        $region43: #{tpu_custom_call.1} parent=39 // pred_region
          %s235 = smul.u32 2, %s17
          %s236 = ssub.s32 3, %s235
          %p237 = scmp.lt.s32.totalorder %s236, 2
          %s238 = scalar_select %p237, %s236, 2
          %s239 = smul.u32 128, %s238
          %p240 = scmp.lt.s32.totalorder %s235, 2
          %s241 = scalar_select %p240, %s235, 2
          %s242 = smul.addr %s241, 8
          %s243 = scalar_lea.vmem %s0, %s242
          %s244 = smul.u32 2, %s17
          %s245 = ssub.s32 3, %s244
          %p246 = scmp.lt.s32.totalorder %s245, 2
          %s247 = scalar_select %p246, %s245, 2
          %s248 = smul.u32 128, %s247
        $region44: #{tpu_custom_call.1} parent=39 // pred_fallthru
          _
      $region40: #{tpu_custom_call.1} parent=5 // pred_fallthru
        _
      %p249 = scmp.le.s32.totalorder 1, %s17
      %p250 = scmp.lt.s32.totalorder %s17, 3
      %p251 = pnand %p249, %p250
      %p252 = pneg %p251
      // Predicated region
      $region45: #{tpu_custom_call.1} parent=5 // pred_check
        _
      $region46: #{tpu_custom_call.1} parent=5 // pred_check_branch
        %254 = sbr.rel (%p251) target = $region48
      $region47: #{tpu_custom_call.1} parent=5 // pred_region
        %s255 = ssub.s32 %s17, 1
        %s256 = smul.u32 2, %s22
        %s257 = ssub.s32 3, %s256
        %p258 = scmp.lt.s32.totalorder %s257, 2
        %s259 = scalar_select %p258, %s257, 2
        %s260 = smul.u32 128, %s259
        %p261 = scmp.lt.s32.totalorder %s256, 2
        %s262 = scalar_select %p261, %s256, 2
        %s263 = smul.addr %s262, 8
        %s264 = scalar_lea.vmem %s0, %s263
        %p265 = pneg %p43
        %p266 = pneg %p40
        %p267 = pneg %p64
        %p268 = pneg %p61
        %p269 = pneg %p85
        %p270 = pneg %p82
        %p271 = pneg %p106
        %p272 = pneg %p103
        %p273 = pneg %p127
        %p274 = pneg %p124
        %p275 = pneg %p148
        %p276 = pneg %p145
        %p277 = pneg %p169
        %p278 = pneg %p166
        %p279 = pneg %p195
        %p280 = pneg %p192
        %s281 = sand.u32 %s182, 1
        %s282 = scalar_lea.sflag [#allocation4], %s281
        %s283 = sand.u32 %s182, 1
        %s284 = scalar_lea.vmem [#allocation3], %s283
        %s285 = smul.u32 2, %s22
        %s286 = ssub.s32 3, %s285
        %p287 = scmp.lt.s32.totalorder %s286, 2
        %s288 = scalar_select %p287, %s286, 2
        %s289 = smul.u32 128, %s288
        %p290 = scmp.lt.s32.totalorder %s285, 2
        %s291 = scalar_select %p290, %s285, 2
        %s292 = smul.addr %s291, 8
        %s293 = scalar_lea.vmem %s0, %s292
        %s294 = smul.u32 2, %s22
        %s295 = ssub.s32 3, %s294
        %p296 = scmp.lt.s32.totalorder %s295, 2
        %s297 = scalar_select %p296, %s295, 2
        %s298 = smul.u32 128, %s297
        %v300 = vld [vmem:[%s293] sm:$0xff]
        %v301 = vld [vmem:[%s293 + $0x8] sm:$0xff]
        %v302 = vpack.c.bf16 %v301, %v300
        %v303 = vld [vmem:[%s1] sm:$0xf]
        %v304 = vld [vmem:[%s1 + $0x4] sm:$0xf]
        %v305 = vld [vmem:[%s1 + $0x8] sm:$0xf]
        %v306 = vld [vmem:[%s1 + $0xc] sm:$0xf]
        %v307 = vld [vmem:[%s1 + $0x10] sm:$0xf]
        %v308 = vld [vmem:[%s1 + $0x14] sm:$0xf]
        %v309 = vld [vmem:[%s1 + $0x18] sm:$0xf]
        %v310 = vld [vmem:[%s1 + $0x1c] sm:$0xf]
        %v311 = vld [vmem:[%s2] sm:$0x1]
        %v313 = vlaneseq
        %v314 = vshrl.u32 %v313, 7
        %v315 = vsub.s32 0, %v314
        %v316 = vrot.slane %v311, %v315
        %v326 = vunpack.c.l.b16 %v303
        %v327 = vunpack.c.l.b16 %v304
        %v328 = vunpack.c.l.b16 %v305
        %v329 = vunpack.c.l.b16 %v306
        %v330 = vunpack.c.l.b16 %v307
        %v331 = vunpack.c.l.b16 %v308
        %v332 = vunpack.c.l.b16 %v309
        %v333 = vunpack.c.l.b16 %v310
        %v334 = vpack.c.b16 %v327, %v326
        %v335 = vpack.c.b16 %v329, %v328
        %v336 = vpack.c.b16 %v331, %v330
        %v337 = vpack.c.b16 %v333, %v332
        %vm342 = vcmask 523264
        %v344 = vsel %vm342, %v302, 0
        %346 = vmatprep.subr.bf16.mxu0 0
        %347 = vmatpush1.bf16.msra.mxu0 %v334
        %348 = vmatprep.subr.bf16.mxu0 0
        %349 = vmatpush1.bf16.msra.mxu0 %v335
        %350 = vmatprep.subr.bf16.mxu0 0
        %351 = vmatpush1.bf16.msra.mxu0 %v336
        %352 = vmatprep.subr.bf16.mxu0 0
        %353 = vmatpush1.bf16.msra.mxu0 %v337
        %354 = vmatprep.subr.bf16.mxu0 0
        %355 = vmatpush1.bf16.msra.mxu0 0
        %356 = vmatprep.subr.bf16.mxu0 0
        %357 = vmatpush1.bf16.msra.mxu0 0
        %358 = vmatprep.subr.bf16.mxu0 0
        %359 = vmatpush1.bf16.msra.mxu0 0
        %360 = vmatprep.subr.bf16.mxu0 0
        %361 = vmatpush1.bf16.msra.mxu0 0
        %362 = vmatprep.subr.bf16.mxu0 0
        %363 = vmatpush1.bf16.msra.mxu0 0
        %364 = vmatprep.subr.bf16.mxu0 0
        %365 = vmatpush1.bf16.msra.mxu0 0
        %366 = vmatprep.subr.bf16.mxu0 0
        %367 = vmatpush1.bf16.msra.mxu0 0
        %368 = vmatprep.subr.bf16.mxu0 0
        %369 = vmatpush1.bf16.msra.mxu0 0
        %370 = vmatprep.subr.bf16.mxu0 0
        %371 = vmatpush1.bf16.msra.mxu0 0
        %372 = vmatprep.subr.bf16.mxu0 0
        %373 = vmatpush1.bf16.msra.mxu0 0
        %374 = vmatprep.subr.bf16.mxu0 0
        %375 = vmatpush1.bf16.msra.mxu0 0
        %376 = vmatprep.subr.bf16.mxu0 0
        %377 = vmatpush1.bf16.msra.mxu0 0
        %378 = vmatprep.mubr.bf16.mxu0 0
        %379 = vmatmul.mubr.bf16.gmra.mrb[0].mxu0 %v344
        %v380 = vpop.f32.mrb[0].mxu0
        %v381 = vadd.f32 %v316, %v380
        %v382 = vpop.f32.mrb[0].mxu0
        %v383 = vpop.f32.mrb[0].mxu0
        %v384 = vadd.f32 %v316, %v383
        %v385 = vpop.f32.mrb[0].mxu0
        %386 = vdwg.mxu0
        %vm387 = vcmp.gt.f32.partialorder %v381, 0.0
        %vm388 = vcmp.gt.f32.partialorder %v384, 0.0
        %v389 = vmul.f32 %v381, 0.2
        %v390 = vmul.f32 %v384, 0.2
        %v391 = vsel %vm387, %v381, %v389
        %v392 = vsel %vm388, %v384, %v390
        %v393 = vpack.c.bf16 %v392, %v391
        %v394 = vld [vmem:[%s3] sm:$0xf]
        %v395 = vld [vmem:[%s3 + $0x4] sm:$0xf]
        %v396 = vld [vmem:[%s3 + $0x8] sm:$0xf]
        %v397 = vld [vmem:[%s3 + $0xc] sm:$0xf]
        %v398 = vld [vmem:[%s4] sm:$0x1]
        %v400 = vlaneseq
        %v401 = vshrl.u32 %v400, 7
        %v402 = vsub.s32 0, %v401
        %v403 = vrot.slane %v398, %v402
        %v409 = vunpack.c.l.b16 %v394
        %v410 = vunpack.c.l.b16 %v395
        %v411 = vunpack.c.l.b16 %v396
        %v412 = vunpack.c.l.b16 %v397
        %v413 = vpack.c.b16 %v410, %v409
        %v414 = vpack.c.b16 %v412, %v411
        %vm417 = vcmask 261120
        %v419 = vsel %vm417, %v393, 0
        %421 = vmatprep.subr.bf16.mxu0 0
        %422 = vmatpush1.bf16.msra.mxu0 %v413
        %423 = vmatprep.subr.bf16.mxu0 0
        %424 = vmatpush1.bf16.msra.mxu0 %v414
        %425 = vmatprep.subr.bf16.mxu0 0
        %426 = vmatpush1.bf16.msra.mxu0 0
        %427 = vmatprep.subr.bf16.mxu0 0
        %428 = vmatpush1.bf16.msra.mxu0 0
        %429 = vmatprep.subr.bf16.mxu0 0
        %430 = vmatpush1.bf16.msra.mxu0 0
        %431 = vmatprep.subr.bf16.mxu0 0
        %432 = vmatpush1.bf16.msra.mxu0 0
        %433 = vmatprep.subr.bf16.mxu0 0
        %434 = vmatpush1.bf16.msra.mxu0 0
        %435 = vmatprep.subr.bf16.mxu0 0
        %436 = vmatpush1.bf16.msra.mxu0 0
        %437 = vmatprep.subr.bf16.mxu0 0
        %438 = vmatpush1.bf16.msra.mxu0 0
        %439 = vmatprep.subr.bf16.mxu0 0
        %440 = vmatpush1.bf16.msra.mxu0 0
        %441 = vmatprep.subr.bf16.mxu0 0
        %442 = vmatpush1.bf16.msra.mxu0 0
        %443 = vmatprep.subr.bf16.mxu0 0
        %444 = vmatpush1.bf16.msra.mxu0 0
        %445 = vmatprep.subr.bf16.mxu0 0
        %446 = vmatpush1.bf16.msra.mxu0 0
        %447 = vmatprep.subr.bf16.mxu0 0
        %448 = vmatpush1.bf16.msra.mxu0 0
        %449 = vmatprep.subr.bf16.mxu0 0
        %450 = vmatpush1.bf16.msra.mxu0 0
        %451 = vmatprep.subr.bf16.mxu0 0
        %452 = vmatpush1.bf16.msra.mxu0 0
        %453 = vmatprep.mubr.bf16.mxu0 0
        %454 = vmatmul.mubr.bf16.gmra.mrb[0].mxu0 %v419
        %v455 = vpop.f32.mrb[0].mxu0
        %v456 = vadd.f32 %v403, %v455
        %v457 = vpop.f32.mrb[0].mxu0
        %v458 = vpop.f32.mrb[0].mxu0
        %v459 = vadd.f32 %v403, %v458
        %v460 = vpop.f32.mrb[0].mxu0
        %461 = vdwg.mxu0
        %vm462 = vcmp.gt.f32.partialorder %v456, 0.0
        %vm463 = vcmp.gt.f32.partialorder %v459, 0.0
        %v464 = vmul.f32 %v456, 0.2
        %v465 = vmul.f32 %v459, 0.2
        %v466 = vsel %vm462, %v456, %v464
        %v467 = vsel %vm463, %v459, %v465
        %v468 = vld [vmem:[%s5] sm:$0xf]
        %v469 = vpack.c.bf16 %v467, %v466
        %v471 = vsel %vm417, %v468, 0
        %v474 = vsel %vm417, %v469, 0
        %476 = vmatprep.subr.bf16.mxu0 0
        %477 = vmatpush1.bf16.xpose.msra.mxu0 %v474
        %478 = vmatprep.subr.bf16.mxu0 0
        %479 = vmatpush1.bf16.xpose.msra.mxu0 0
        %480 = vmatprep.subr.bf16.mxu0 0
        %481 = vmatpush1.bf16.xpose.msra.mxu0 0
        %482 = vmatprep.subr.bf16.mxu0 0
        %483 = vmatpush1.bf16.xpose.msra.mxu0 0
        %484 = vmatprep.subr.bf16.mxu0 0
        %485 = vmatpush1.bf16.xpose.msra.mxu0 0
        %486 = vmatprep.subr.bf16.mxu0 0
        %487 = vmatpush1.bf16.xpose.msra.mxu0 0
        %488 = vmatprep.subr.bf16.mxu0 0
        %489 = vmatpush1.bf16.xpose.msra.mxu0 0
        %490 = vmatprep.subr.bf16.mxu0 0
        %491 = vmatpush1.bf16.xpose.msra.mxu0 0
        %492 = vmatprep.subr.bf16.mxu0 0
        %493 = vmatpush1.bf16.xpose.msra.mxu0 0
        %494 = vmatprep.subr.bf16.mxu0 0
        %495 = vmatpush1.bf16.xpose.msra.mxu0 0
        %496 = vmatprep.subr.bf16.mxu0 0
        %497 = vmatpush1.bf16.xpose.msra.mxu0 0
        %498 = vmatprep.subr.bf16.mxu0 0
        %499 = vmatpush1.bf16.xpose.msra.mxu0 0
        %500 = vmatprep.subr.bf16.mxu0 0
        %501 = vmatpush1.bf16.xpose.msra.mxu0 0
        %502 = vmatprep.subr.bf16.mxu0 0
        %503 = vmatpush1.bf16.xpose.msra.mxu0 0
        %504 = vmatprep.subr.bf16.mxu0 0
        %505 = vmatpush1.bf16.xpose.msra.mxu0 0
        %506 = vmatprep.subr.bf16.mxu0 0
        %507 = vmatpush1.bf16.xpose.msra.mxu0 0
        %508 = vmatprep.mubr.bf16.mxu0 0
        %509 = vmatmul.mubr.bf16.gmra.mrb[0].mxu0 %v471
        %v510 = vpop.f32.mrb[0].mxu0
        %v511 = vadd.f32 0.0, %v510
        %v512 = vpop.f32.mrb[0].mxu0
        %v513 = vpop.f32.mrb[0].mxu0
        %v514 = vpop.f32.mrb[0].mxu0
        %515 = vdwg.mxu0
        %s516 = sld [smem:[#allocation2]]
        %v517 = vstv %s516
        %v518 = vadd.f32 %v511, %v517
        %v519 = vsub.f32 0.0, %v518
        %v520 = vmul.f32 %v519, 1.442695
        %v521 = vpow.pop %v520
        %v522 = vadd.f32 %v521, 1.0
        %v523 = vrcp.pop %v522
        %v524 = vmul.f32 1.0, %v523
        %vm525 = vcmask 122880
        %526 = vst.msk [vmem:[%s284] sm:$0x1] %vm525, %v524
        %s527 = sand.u32 %s182, 1
        %s528 = scalar_lea.sflag [#allocation4], %s527
        %s529 = sand.u32 %s182, 1
        %s530 = scalar_lea.vmem [#allocation3], %s529
        // Predicated region
        $region49: #{tpu_custom_call.1} parent=47 // pred_check
          %p531 = pneg %p192
        $region50: #{tpu_custom_call.1} parent=47 // pred_check_branch
          %533 = sbr.rel (%p531) target = $region52
        $region51: #{tpu_custom_call.1} parent=47 // pred_region
          %s535 = ssub.s32 16, 16
          %536 = vsyncadd %s528, %s535
          %s537 = smul.addr %s22, 16
          %s538 = scalar_lea.hbm %s7, %s537
          %s540 = sshll.u32 %s530, 4
          %s541 = int_to_ptr.vmem [resolvable:$true] %s540
          %543 = dma.vmem_to_hbm [thread:$0]  %s541, 16, %s538, %s528
        $region52: #{tpu_custom_call.1} parent=47 // pred_fallthru
          _
      $region48: #{tpu_custom_call.1} parent=5 // pred_fallthru
        _
      %p544 = scmp.le.s32.totalorder 2, %s17
      // Predicated region
      $region53: #{tpu_custom_call.1} parent=5 // pred_check
        %p545 = pneg %p544
      $region54: #{tpu_custom_call.1} parent=5 // pred_check_branch
        %547 = sbr.rel (%p545) target = $region56
      $region55: #{tpu_custom_call.1} parent=5 // pred_region
        %s548 = ssub.s32 %s17, 2
        // Predicated region
        $region57: #{tpu_custom_call.1} parent=55 // pred_check
          %p549 = pneg %p198
        $region58: #{tpu_custom_call.1} parent=55 // pred_check_branch
          %551 = sbr.rel (%p549) target = $region60
        $region59: #{tpu_custom_call.1} parent=55 // pred_region
          %s552 = sand.u32 %s183, 1
          %s553 = scalar_lea.sflag [#allocation4], %s552
          %s554 = sand.u32 %s183, 1
          %s555 = scalar_lea.vmem [#allocation3], %s554
          %556 = dma.done %s553, 16
        $region60: #{tpu_custom_call.1} parent=55 // pred_fallthru
          _
      $region56: #{tpu_custom_call.1} parent=5 // pred_fallthru
        _
    $region6: #{tpu_custom_call.1} parent=1 // loop_footer
      %s21 = sadd.s32 1, %s17
    $region7: #{tpu_custom_call.1} parent=1 // loop_footer_branch
      %16 = sbr.rel target = $region3
    $region8: #{tpu_custom_call.1} parent=1 // loop_exit
      _
    %557 = vsyncpa [#allocation4], 1
    %s558 = scalar_lea.sflag [#allocation4], 1
    %559 = vsyncpa %s558, 1

</llo_original>
